<compile_context>
chip_gen: v6e
topology: v6e:2x2x1
jax: 0.10.0
libtpu: 0.0.40
codegen_flags: <defaults>
</compile_context>

<pallas_src>
import jax
import jax.numpy as jnp
import numpy as np
from jax.experimental import pallas as pl
from jax.experimental.pallas import tpu as pltpu


def _round_up(a: int, b: int) -> int:
    return (a + b - 1) // b * b


def _stochastic_depth_scale_kernel(x_ref, s_ref, o_ref):
    """Broadcast multiply: out[tile_n, tile_f] = x[tile_n, tile_f] * scale[tile_n, 1]."""
    o_ref[...] = x_ref[...] * s_ref[...].astype(x_ref.dtype)


def _pick_row_tile(n_pad: int, cap: int = 256) -> int:
    # Largest multiple of 8 that divides n_pad and is <= cap.
    hi = min(n_pad, cap)
    return max(t for t in range(8, hi + 1, 8) if n_pad % t == 0)


def _pick_feat_tile(f_pad: int, cap: int = 2048) -> int:
    # Largest multiple of 128 that divides f_pad and is <= cap (keeps lanes dense).
    hi = min(f_pad, cap)
    return max(t for t in range(128, hi + 1, 128) if f_pad % t == 0)


def stochastic_depth(x, p: float, mode: str = "row", training: bool = True, seed: int = 0):
    """JAX/Pallas equivalent of torchvision.ops.stochastic_depth."""
    if p < 0.0 or p > 1.0:
        raise ValueError(f"p must be in [0, 1], got {p}")
    if mode not in ("row", "batch"):
        raise ValueError(f"mode must be 'row' or 'batch', got {mode}")
    if not training or p == 0.0:
        return x
    if p == 1.0:
        return jnp.zeros_like(x)

    survival_rate = 1.0 - p
    n = x.shape[0]
    f = int(np.prod(x.shape[1:]))
    x2d = x.reshape(n, f)

    # Per-row scale vector, computed once outside the hot kernel.
    key = jax.random.PRNGKey(seed)
    if mode == "row":
        keep = jax.random.bernoulli(key, survival_rate, (n, 1))
    else:  # "batch": one decision for the whole batch
        keep = jnp.broadcast_to(jax.random.bernoulli(key, survival_rate, (1, 1)), (n, 1))
    scale = keep.astype(jnp.float32) * (1.0 / survival_rate)  # (n, 1) f32

    # Pad to tileable shape (rows -> multiple of 8, features -> multiple of 128).
    n_pad = _round_up(n, 8)
    f_pad = _round_up(f, 128)
    tile_n = _pick_row_tile(n_pad)
    tile_f = _pick_feat_tile(f_pad)

    if (n_pad, f_pad) != (n, f):
        x2d = jnp.pad(x2d, ((0, n_pad - n), (0, f_pad - f)))
    if n_pad != n:
        scale = jnp.pad(scale, ((0, n_pad - n), (0, 0)))

    grid = (n_pad // tile_n, f_pad // tile_f)

    out2d = pl.pallas_call(
        _stochastic_depth_scale_kernel,
        out_shape=jax.ShapeDtypeStruct((n_pad, f_pad), x.dtype),
        grid_spec=pltpu.PrefetchScalarGridSpec(
            num_scalar_prefetch=0,
            grid=grid,
            in_specs=[
                pl.BlockSpec((tile_n, tile_f), lambda i, j: (i, j)),  # x tile
                pl.BlockSpec((tile_n, 1), lambda i, j: (i, 0)),       # per-row scale
            ],
            out_specs=pl.BlockSpec((tile_n, tile_f), lambda i, j: (i, j)),
        ),
        compiler_params=pltpu.CompilerParams(
            dimension_semantics=("parallel", "parallel"),
            vmem_limit_bytes=32 * 1024 * 1024,
        ),
        input_output_aliases={0: 0},  # reuse the (padded) input buffer for the output
    )(x2d, scale)

    if (n_pad, f_pad) != (n, f):
        out2d = out2d[:n, :f]
    return out2d.reshape(x.shape)


class StochasticDepthWrapper:
    """Mirror of the PyTorch wrapper: holds the layer config and calls it in forward.

    Note: the original PyTorch forward has no `return`; we return the result so the
    kernel output can be checked.
    """

    def __init__(self, p: float = 0.5, mode: str = "row"):
        self.p = p
        self.mode = mode
        self.n_inputs = 1

    def forward(self, a, training: bool = True, seed: int = 0):
        return stochastic_depth(a, self.p, self.mode, training=training, seed=seed)


if __name__ == "__main__":
    key = jax.random.PRNGKey(0)
    x = jax.random.normal(key, (2, 4, 16, 16), dtype=jnp.float32)

    p = 0.5
    wrapper = StochasticDepthWrapper(p=p, mode="row")
    y = wrapper.forward(x, training=True, seed=0)
    jax.block_until_ready(y)

    # Correctness: each sample is either all zeros (dropped) or x / (1 - p) (kept).
    xn = np.asarray(x).reshape(x.shape[0], -1)
    yn = np.asarray(y).reshape(x.shape[0], -1)
    for i in range(x.shape[0]):
        dropped = np.allclose(yn[i], 0.0)
        kept = np.allclose(yn[i], xn[i] / (1.0 - p), rtol=1e-5, atol=1e-5)
        assert dropped or kept, f"row {i}: output is neither dropped nor correctly scaled"

    # Eval mode is identity.
    y_eval = wrapper.forward(x, training=False)
    assert np.allclose(np.asarray(y_eval), np.asarray(x))

    # Batch mode: whole batch either kept (scaled) or dropped together.
    yb = np.asarray(
        StochasticDepthWrapper(p=p, mode="batch").forward(x, training=True, seed=3)
    ).reshape(x.shape[0], -1)
    assert np.allclose(yb, 0.0) or np.allclose(yb, xn / (1.0 - p), rtol=1e-5, atol=1e-5)

    print("KERNEL_OK")
</pallas_src>

<mosaic_0001>
module attributes {stable_mosaic.version = 11 : i64} {
  func.func @_stochastic_depth_scale_kernel(%arg0: i32, %arg1: i32, %arg2: memref<8x1024xf32, #tpu.memory_space<vmem>>, %arg3: memref<8x1xf32, #tpu.memory_space<vmem>>, %arg4: memref<8x1024xf32, #tpu.memory_space<vmem>>) attributes {dimension_semantics = [#tpu.dimension_semantics<parallel>, #tpu.dimension_semantics<parallel>], iteration_bounds = array<i64: 1, 1>, scalar_prefetch = 0 : i64, scratch_operands = 0 : i64, tpu.core_type = #tpu.core_type<tc>, window_params = [{transform_indices = @transform_0, window_bounds = array<i64: 8, 1024>}, {transform_indices = @transform_1, window_bounds = array<i64: 8, 1>}, {transform_indices = @transform_2, window_bounds = array<i64: 8, 1024>}]} {
    %c0 = arith.constant 0 : index
    %c0_0 = arith.constant 0 : index
    %0 = vector.load %arg2[%c0, %c0_0] : memref<8x1024xf32, #tpu.memory_space<vmem>>, vector<8x1024xf32>
    %c0_1 = arith.constant 0 : index
    %c0_2 = arith.constant 0 : index
    %1 = vector.load %arg3[%c0_1, %c0_2] : memref<8x1xf32, #tpu.memory_space<vmem>>, vector<8x1xf32>
    %2 = vector.broadcast %1 : vector<8x1xf32> to vector<8x1024xf32>
    %3 = arith.mulf %0, %2 : vector<8x1024xf32>
    %c0_3 = arith.constant 0 : index
    %c0_4 = arith.constant 0 : index
    %4 = vector.load %arg4[%c0_3, %c0_4] : memref<8x1024xf32, #tpu.memory_space<vmem>>, vector<8x1024xf32>
    tpu.vector_store %arg4[%c0_3, %c0_4], %3 {strides = array<i32>} : memref<8x1024xf32, #tpu.memory_space<vmem>>, vector<8x1024xf32>,
    return
  }
  func.func @transform_0(%arg0: i32, %arg1: i32) -> (i32, i32) {
    %c0_i32 = arith.constant 0 : i32
    return %arg0, %arg1 : i32, i32
  }
  func.func @transform_1(%arg0: i32, %arg1: i32) -> (i32, i32) {
    %c0_i32 = arith.constant 0 : i32
    %c0_i32_0 = arith.constant 0 : i32
    return %arg0, %c0_i32 : i32, i32
  }
  func.func @transform_2(%arg0: i32, %arg1: i32) -> (i32, i32) {
    %c0_i32 = arith.constant 0 : i32
    return %arg0, %arg1 : i32, i32
  }
}

</mosaic_0001>

<llo_original>
// kernel: tpu_custom_call.1
$region0: #{tpu_custom_call.1}
  #allocation0 [shape = 'u32[]', space=smem, size = 0x4, offset = 0x4, fixed_abs, tag = 'smem constant byte address 0x4 - core index']
  #allocation1 [shape = 'u32[144,128]{1,0:T(1,128)}', space=vmem, size = 0x12000, scoped, tag = 'internal scratch']
  %s0 = inlined_call_operand.hbm [shape: f32[8,1024], index: 0, kind: input, shape index: {}, may-alias: {0,2}]
  %s1 = inlined_call_operand.vmem [shape: f32[8,1], index: 1, kind: input, shape index: {}]
  %s2 = inlined_call_operand.hbm [shape: f32[8,1024], index: 2, kind: output, shape index: {}, may-alias: {0,2}]
  %s3 = sld [smem:[#allocation0]]
  $region22: #{tpu_custom_call.1} parent=0
    _
  %s5 = ssub.s32 1, %s3
  %s6 = scalar_select 0, %s5, %s3
  $region1: #{tpu_custom_call.1} parent=0
    #allocation2 [shape = 'u8[32768]{0}', space=vmem, size = 0x8000, scoped, tag = 'input window, operand 0, single buffered']
    #allocation3 [shape = 's32[1]{0}', space=sflag, size = 0x4, scoped, tag = 'scoped memory for tpu_custom_call.1']
    #allocation4 [shape = 's32[1]{0}', space=sflag, size = 0x4, scoped, tag = 'scoped memory for tpu_custom_call.1']
    #allocation5 [shape = 'u8[32768]{0}', space=vmem, size = 0x8000, scoped, tag = 'output window, operand 0, single buffered']
    %7 = vsyncpa [#allocation3], 0
    %8 = vsyncpa [#allocation4], 0
    // Predicated region
    $region2: #{tpu_custom_call.1} parent=1 // pred_check
      _
    $region3: #{tpu_custom_call.1} parent=1 // pred_check_branch
      %10 = sbr.rel (0) target = $region5
    $region4: #{tpu_custom_call.1} parent=1 // pred_region
      %s12 = ssub.s32 1024, 1024
      %13 = vsyncadd [#allocation3], %s12
      %s15 = sshll.u32 [#allocation2], 4
      %s16 = int_to_ptr.vmem [resolvable:$true] %s15
      %18 = dma.hbm_to_vmem [thread:$0]  %s0, 1024, %s16, [#allocation3]
    $region5: #{tpu_custom_call.1} parent=1 // pred_fallthru
      _
    // Predicated region
    $region6: #{tpu_custom_call.1} parent=1 // pred_check
      _
    $region7: #{tpu_custom_call.1} parent=1 // pred_check_branch
      %20 = sbr.rel (0) target = $region9
    $region8: #{tpu_custom_call.1} parent=1 // pred_region
      _
    $region9: #{tpu_custom_call.1} parent=1 // pred_fallthru
      _
    // Predicated region
    $region10: #{tpu_custom_call.1} parent=1 // pred_check
      _
    $region11: #{tpu_custom_call.1} parent=1 // pred_check_branch
      %22 = sbr.rel (0) target = $region13
    $region12: #{tpu_custom_call.1} parent=1 // pred_region
      %23 = dma.done [#allocation3], 1024
    $region13: #{tpu_custom_call.1} parent=1 // pred_fallthru
      _
    %v24 = vld [vmem:[#allocation2] sm:$0xff]
    %v25 = vld [vmem:[#allocation2 + $0x8] sm:$0xff]
    %v26 = vld [vmem:[#allocation2 + $0x10] sm:$0xff]
    %v27 = vld [vmem:[#allocation2 + $0x18] sm:$0xff]
    %v28 = vld [vmem:[#allocation2 + $0x20] sm:$0xff]
    %v29 = vld [vmem:[#allocation2 + $0x28] sm:$0xff]
    %v30 = vld [vmem:[#allocation2 + $0x30] sm:$0xff]
    %v31 = vld [vmem:[#allocation2 + $0x38] sm:$0xff]
    %v32 = vld [vmem:[%s1] sm:$0xff]
    %34 = vset.pattern.permute.xlu0 0
    %35 = vperm.xlu0 %34, %v32
    %v36 = vpop.permute.xlu0 %35
    %v38 = vmul.f32 %v24, %v36
    %v39 = vmul.f32 %v25, %v36
    %v40 = vmul.f32 %v26, %v36
    %v41 = vmul.f32 %v27, %v36
    %v42 = vmul.f32 %v28, %v36
    %v43 = vmul.f32 %v29, %v36
    %v44 = vmul.f32 %v30, %v36
    %v45 = vmul.f32 %v31, %v36
    %46 = vst [vmem:[#allocation5] sm:$0xff] %v38
    %47 = vst [vmem:[#allocation5 + $0x8] sm:$0xff] %v39
    %48 = vst [vmem:[#allocation5 + $0x10] sm:$0xff] %v40
    %49 = vst [vmem:[#allocation5 + $0x18] sm:$0xff] %v41
    %50 = vst [vmem:[#allocation5 + $0x20] sm:$0xff] %v42
    %51 = vst [vmem:[#allocation5 + $0x28] sm:$0xff] %v43
    %52 = vst [vmem:[#allocation5 + $0x30] sm:$0xff] %v44
    %53 = vst [vmem:[#allocation5 + $0x38] sm:$0xff] %v45
    // Predicated region
    $region14: #{tpu_custom_call.1} parent=1 // pred_check
      _
    $region15: #{tpu_custom_call.1} parent=1 // pred_check_branch
      %55 = sbr.rel (0) target = $region17
    $region16: #{tpu_custom_call.1} parent=1 // pred_region
      %s57 = ssub.s32 1024, 1024
      %58 = vsyncadd [#allocation4], %s57
      %s60 = sshll.u32 [#allocation5], 4
      %s61 = int_to_ptr.vmem [resolvable:$true] %s60
      %63 = dma.vmem_to_hbm [thread:$0]  %s61, 1024, %s2, [#allocation4]
    $region17: #{tpu_custom_call.1} parent=1 // pred_fallthru
      _
    // Predicated region
    $region18: #{tpu_custom_call.1} parent=1 // pred_check
      _
    $region19: #{tpu_custom_call.1} parent=1 // pred_check_branch
      %65 = sbr.rel (0) target = $region21
    $region20: #{tpu_custom_call.1} parent=1 // pred_region
      %66 = dma.done [#allocation4], 1024
    $region21: #{tpu_custom_call.1} parent=1 // pred_fallthru
      _
    %67 = vsyncpa [#allocation3], 1
    %68 = vsyncpa [#allocation4], 1

</llo_original>
